<compile_context>
chip_gen: v5e
topology: v5e:2x2
jax: 0.10.0
libtpu: 0.0.40
codegen_flags: <defaults>
</compile_context>

<pallas_src>
import functools

import jax
import jax.numpy as jnp
from jax.experimental import pallas as pl
from jax.experimental.pallas import tpu as pltpu

PACK = 8        # batch rows packed per lane-row
HIDDEN = 32     # fc1/fc2 width fixed by the PyTorch module


def _round_up(n, m):
    return ((n + m - 1) // m) * m


def valuefun_kernel(x_ref, w1_ref, b1_ref, w2_ref, b2_ref, w3_ref, b3_ref, o_ref):
    # fc1 + relu  (bf16 MXU operands, f32 accumulate, f32 elementwise)
    x = x_ref[...].astype(jnp.bfloat16)
    h1 = jnp.dot(x, w1_ref[...], preferred_element_type=jnp.float32)
    h1 = jnp.maximum(h1 + b1_ref[...], 0.0)
    # fc2 + relu
    h2 = jnp.dot(h1.astype(jnp.bfloat16), w2_ref[...],
                 preferred_element_type=jnp.float32)
    h2 = jnp.maximum(h2 + b2_ref[...], 0.0)
    # fc3: block-diagonal (256 -> 8) -> one value per packed batch row; small MXU dot.
    out = jnp.dot(h2.astype(jnp.bfloat16), w3_ref[...],
                  preferred_element_type=jnp.float32) + b3_ref[...]
    o_ref[...] = out.astype(o_ref.dtype)


@functools.partial(jax.jit, static_argnames=("tm",))
def valuefun_forward(x, params, *, tm=8192):
    """x: [B, obs_dim] float32.  Returns [B, 1] float32.  tm = batch rows per tile."""
    w1, b1 = params["w1_blk"], params["b1_blk"]
    w2, b2 = params["w2_blk"], params["b2_blk"]
    w3, b3 = params["w3_blk"], params["b3_blk"]

    B, obs_dim = x.shape
    # Pad only to a multiple of the packing factor (at most 7 rows; usually a no-op).
    B8 = _round_up(B, PACK)
    if B8 != B:
        x = jnp.pad(x, ((0, B8 - B), (0, 0)))
    Bp = B8 // PACK
    Kp = PACK * obs_dim
    xp = x.reshape(Bp, Kp)   # free contiguous reshape: 8 batch rows per lane-row

    # Packed-row tile: multiple of 8 (sublane tiling), never much bigger than the
    # batch, and kept to >= 2 grid steps when there is enough work so v7x's second
    # TensorCore is used (the grid axis is marked "parallel").
    tm_p = _round_up(max(PACK, tm // PACK), 8)
    if Bp >= 16:
        tm_p = min(tm_p, _round_up(pl.cdiv(Bp, 2), 8))
    tm_p = min(tm_p, _round_up(Bp, 8))
    grid = (pl.cdiv(Bp, tm_p),)   # partial last block handled by Pallas (rows independent)

    out = pl.pallas_call(
        valuefun_kernel,
        out_shape=jax.ShapeDtypeStruct((Bp, PACK), jnp.float32),
        grid=grid,
        in_specs=[
            # x: one lane-dense (tm_p, PACK*obs_dim) tile per grid step (double-buffered).
            pl.BlockSpec((tm_p, Kp), lambda i: (i, 0)),
            # Parameters: constant index maps -> resident in VMEM across steps.
            pl.BlockSpec(w1.shape, lambda i: (0, 0)),
            pl.BlockSpec(b1.shape, lambda i: (0, 0)),
            pl.BlockSpec(w2.shape, lambda i: (0, 0)),
            pl.BlockSpec(b2.shape, lambda i: (0, 0)),
            pl.BlockSpec(w3.shape, lambda i: (0, 0)),
            pl.BlockSpec(b3.shape, lambda i: (0, 0)),
        ],
        # Lane-dense output: 8 values per packed row (reshaped to (B, 1) in the wrapper).
        out_specs=pl.BlockSpec((tm_p, PACK), lambda i: (i, 0)),
        compiler_params=pltpu.CompilerParams(
            dimension_semantics=("parallel",),     # batch tiles independent (megacore)
            vmem_limit_bytes=32 * 1024 * 1024,     # headroom if tm is raised (v5e default 16 MiB)
        ),
    )(xp, w1, b1, w2, b2, w3, b3)

    # (Bp, 8) row r / col j  ==  batch row 8*r + j  ->  (B, 1)
    return out.reshape(B8, 1)[:B]


def init_params(key, obs_dim, hidden=HIDDEN):
    """PyTorch nn.Linear-style init U(-1/sqrt(fan_in), +1/sqrt(fan_in)).

    Returns plain [in, out] f32 weights (reference / checkpointing) plus the
    lane-packed block-diagonal bf16 weights used by the kernel, with biases tiled
    PACK times along the lane dimension (f32).
    """
    ks = jax.random.split(key, 6)

    def lin(kw, kb, fan_in, fan_out):
        bound = 1.0 / jnp.sqrt(jnp.float32(fan_in))
        w = jax.random.uniform(kw, (fan_in, fan_out), jnp.float32, -bound, bound)
        b = jax.random.uniform(kb, (1, fan_out), jnp.float32, -bound, bound)
        return w, b

    w1, b1 = lin(ks[0], ks[1], obs_dim, hidden)
    w2, b2 = lin(ks[2], ks[3], hidden, hidden)
    w3, b3 = lin(ks[4], ks[5], hidden, 1)

    eye = jnp.eye(PACK, dtype=jnp.float32)

    def blockdiag(w):
        return jnp.kron(eye, w)   # (PACK*in, PACK*out), w on the diagonal

    return {
        # plain [in, out] f32 (used by the pure-JAX reference)
        "w1": w1, "b1": b1, "w2": w2, "b2": b2, "w3": w3, "b3": b3,
        # packed block-diagonal weights used by the kernel
        "w1_blk": blockdiag(w1).astype(jnp.bfloat16),
        "b1_blk": jnp.tile(b1, (1, PACK)),
        "w2_blk": blockdiag(w2).astype(jnp.bfloat16),
        "b2_blk": jnp.tile(b2, (1, PACK)),
        "w3_blk": blockdiag(w3).astype(jnp.bfloat16),
        "b3_blk": jnp.tile(b3, (1, PACK)),
    }


def reference_forward(x, p):
    """Pure-JAX reference with the same bf16-operand / f32-accumulate numerics."""
    bf = jnp.bfloat16
    h1 = jnp.dot(x.astype(bf), p["w1"].astype(bf),
                 preferred_element_type=jnp.float32) + p["b1"]
    h1 = jnp.maximum(h1, 0.0)
    h2 = jnp.dot(h1.astype(bf), p["w2"].astype(bf),
                 preferred_element_type=jnp.float32) + p["b2"]
    h2 = jnp.maximum(h2, 0.0)
    return jnp.dot(h2.astype(bf), p["w3"].astype(bf),
                   preferred_element_type=jnp.float32) + p["b3"]


if __name__ == "__main__":
    key = jax.random.PRNGKey(0)
    k_param, k_x1, k_x2 = jax.random.split(key, 3)

    obs_dim = 16
    params = init_params(k_param, obs_dim)

    # Case 1: tiny batch -> single grid step, single (partial) packed tile.
    x_small = jax.random.normal(k_x1, (8, obs_dim), jnp.float32)
    out_small = jax.block_until_ready(valuefun_forward(x_small, params))
    ref_small = reference_forward(x_small, params)
    assert out_small.shape == (8, 1)
    assert jnp.allclose(out_small, ref_small, atol=2e-3, rtol=1e-3), "mismatch (small)"

    # Case 2: ragged batch (not a multiple of 8), default tile -> pad-to-8 path,
    # 2-step "parallel" grid with a partial last block.
    x_big = jax.random.normal(k_x2, (300, obs_dim), jnp.float32)
    out_big = jax.block_until_ready(valuefun_forward(x_big, params))
    ref_big = reference_forward(x_big, params)
    assert out_big.shape == (300, 1)
    assert jnp.allclose(out_big, ref_big, atol=2e-3, rtol=1e-3), "mismatch (ragged)"

    # Case 3: small explicit tm -> multi-step grid exercising the pipeline.
    out_tiled = jax.block_until_ready(valuefun_forward(x_big, params, tm=64))
    assert out_tiled.shape == (300, 1)
    assert jnp.allclose(out_tiled, ref_big, atol=2e-3, rtol=1e-3), "mismatch (tiled)"

    print("KERNEL_OK")
</pallas_src>

<mosaic_0001>
module attributes {stable_mosaic.version = 11 : i64} {
  func.func @valuefun_kernel(%arg0: i32, %arg1: memref<8x128xf32, #tpu.memory_space<vmem>>, %arg2: memref<128x256xbf16, #tpu.memory_space<vmem>>, %arg3: memref<1x256xf32, #tpu.memory_space<vmem>>, %arg4: memref<256x256xbf16, #tpu.memory_space<vmem>>, %arg5: memref<1x256xf32, #tpu.memory_space<vmem>>, %arg6: memref<256x8xbf16, #tpu.memory_space<vmem>>, %arg7: memref<1x8xf32, #tpu.memory_space<vmem>>, %arg8: memref<8x8xf32, #tpu.memory_space<vmem>>) attributes {dimension_semantics = [#tpu.dimension_semantics<parallel>], iteration_bounds = array<i64: 1>, scalar_prefetch = 0 : i64, scratch_operands = 0 : i64, tpu.core_type = #tpu.core_type<tc>, window_params = [{transform_indices = @transform_0, window_bounds = array<i64: 8, 128>}, {pipeline_mode = #tpu.pipeline_mode<synchronous>, transform_indices = @transform_1, window_bounds = array<i64: 128, 256>}, {pipeline_mode = #tpu.pipeline_mode<synchronous>, transform_indices = @transform_2, window_bounds = array<i64: 1, 256>}, {pipeline_mode = #tpu.pipeline_mode<synchronous>, transform_indices = @transform_3, window_bounds = array<i64: 256, 256>}, {pipeline_mode = #tpu.pipeline_mode<synchronous>, transform_indices = @transform_4, window_bounds = array<i64: 1, 256>}, {pipeline_mode = #tpu.pipeline_mode<synchronous>, transform_indices = @transform_5, window_bounds = array<i64: 256, 8>}, {pipeline_mode = #tpu.pipeline_mode<synchronous>, transform_indices = @transform_6, window_bounds = array<i64: 1, 8>}, {transform_indices = @transform_7, window_bounds = array<i64: 8, 8>}]} {
    %c0 = arith.constant 0 : index
    %c0_0 = arith.constant 0 : index
    %0 = vector.load %arg1[%c0, %c0_0] : memref<8x128xf32, #tpu.memory_space<vmem>>, vector<8x128xf32>
    %1 = arith.truncf %0 : vector<8x128xf32> to vector<8x128xbf16>
    %c0_1 = arith.constant 0 : index
    %c0_2 = arith.constant 0 : index
    %2 = vector.load %arg2[%c0_1, %c0_2] : memref<128x256xbf16, #tpu.memory_space<vmem>>, vector<128x256xbf16>
    %cst = arith.constant dense<0.000000e+00> : vector<8x256xf32>
    %3 = tpu.matmul %1, %2, %cst {dimension_numbers = #tpu.dot_dimension_numbers<[1], [0], [0], [1], [0, 0, 1, 1], [], []>} : vector<8x128xbf16>, vector<128x256xbf16>, vector<8x256xf32> -> vector<8x256xf32>
    %c0_3 = arith.constant 0 : index
    %c0_4 = arith.constant 0 : index
    %4 = vector.load %arg3[%c0_3, %c0_4] : memref<1x256xf32, #tpu.memory_space<vmem>>, vector<1x256xf32>
    %5 = vector.broadcast %4 : vector<1x256xf32> to vector<8x256xf32>
    %6 = arith.addf %3, %5 : vector<8x256xf32>
    %cst_5 = arith.constant 0.000000e+00 : f32
    %7 = vector.broadcast %cst_5 : f32 to vector<8x256xf32>
    %8 = arith.maximumf %6, %7 : vector<8x256xf32>
    %9 = arith.truncf %8 : vector<8x256xf32> to vector<8x256xbf16>
    %c0_6 = arith.constant 0 : index
    %c0_7 = arith.constant 0 : index
    %10 = vector.load %arg4[%c0_6, %c0_7] : memref<256x256xbf16, #tpu.memory_space<vmem>>, vector<256x256xbf16>
    %cst_8 = arith.constant dense<0.000000e+00> : vector<8x256xf32>
    %11 = tpu.matmul %9, %10, %cst_8 {dimension_numbers = #tpu.dot_dimension_numbers<[1], [0], [0], [1], [0, 0, 1, 1], [], []>} : vector<8x256xbf16>, vector<256x256xbf16>, vector<8x256xf32> -> vector<8x256xf32>
    %c0_9 = arith.constant 0 : index
    %c0_10 = arith.constant 0 : index
    %12 = vector.load %arg5[%c0_9, %c0_10] : memref<1x256xf32, #tpu.memory_space<vmem>>, vector<1x256xf32>
    %13 = vector.broadcast %12 : vector<1x256xf32> to vector<8x256xf32>
    %14 = arith.addf %11, %13 : vector<8x256xf32>
    %cst_11 = arith.constant 0.000000e+00 : f32
    %15 = vector.broadcast %cst_11 : f32 to vector<8x256xf32>
    %16 = arith.maximumf %14, %15 : vector<8x256xf32>
    %17 = arith.truncf %16 : vector<8x256xf32> to vector<8x256xbf16>
    %c0_12 = arith.constant 0 : index
    %c0_13 = arith.constant 0 : index
    %18 = vector.load %arg6[%c0_12, %c0_13] : memref<256x8xbf16, #tpu.memory_space<vmem>>, vector<256x8xbf16>
    %cst_14 = arith.constant dense<0.000000e+00> : vector<8x8xf32>
    %19 = tpu.matmul %17, %18, %cst_14 {dimension_numbers = #tpu.dot_dimension_numbers<[1], [0], [0], [1], [0, 0, 1, 1], [], []>} : vector<8x256xbf16>, vector<256x8xbf16>, vector<8x8xf32> -> vector<8x8xf32>
    %c0_15 = arith.constant 0 : index
    %c0_16 = arith.constant 0 : index
    %20 = vector.load %arg7[%c0_15, %c0_16] : memref<1x8xf32, #tpu.memory_space<vmem>>, vector<1x8xf32>
    %21 = vector.broadcast %20 : vector<1x8xf32> to vector<8x8xf32>
    %22 = arith.addf %19, %21 : vector<8x8xf32>
    %c0_17 = arith.constant 0 : index
    %c0_18 = arith.constant 0 : index
    %23 = vector.load %arg8[%c0_17, %c0_18] : memref<8x8xf32, #tpu.memory_space<vmem>>, vector<8x8xf32>
    tpu.vector_store %arg8[%c0_17, %c0_18], %22 {strides = array<i32>} : memref<8x8xf32, #tpu.memory_space<vmem>>, vector<8x8xf32>,
    return
  }
  func.func @transform_0(%arg0: i32) -> (i32, i32) {
    %c0_i32 = arith.constant 0 : i32
    %c0_i32_0 = arith.constant 0 : i32
    return %arg0, %c0_i32 : i32, i32
  }
  func.func @transform_1(%arg0: i32) -> (i32, i32) {
    %c0_i32 = arith.constant 0 : i32
    %c0_i32_0 = arith.constant 0 : i32
    %c0_i32_1 = arith.constant 0 : i32
    return %c0_i32, %c0_i32_0 : i32, i32
  }
  func.func @transform_2(%arg0: i32) -> (i32, i32) {
    %c0_i32 = arith.constant 0 : i32
    %c0_i32_0 = arith.constant 0 : i32
    %c0_i32_1 = arith.constant 0 : i32
    return %c0_i32, %c0_i32_0 : i32, i32
  }
  func.func @transform_3(%arg0: i32) -> (i32, i32) {
    %c0_i32 = arith.constant 0 : i32
    %c0_i32_0 = arith.constant 0 : i32
    %c0_i32_1 = arith.constant 0 : i32
    return %c0_i32, %c0_i32_0 : i32, i32
  }
  func.func @transform_4(%arg0: i32) -> (i32, i32) {
    %c0_i32 = arith.constant 0 : i32
    %c0_i32_0 = arith.constant 0 : i32
    %c0_i32_1 = arith.constant 0 : i32
    return %c0_i32, %c0_i32_0 : i32, i32
  }
  func.func @transform_5(%arg0: i32) -> (i32, i32) {
    %c0_i32 = arith.constant 0 : i32
    %c0_i32_0 = arith.constant 0 : i32
    %c0_i32_1 = arith.constant 0 : i32
    return %c0_i32, %c0_i32_0 : i32, i32
  }
  func.func @transform_6(%arg0: i32) -> (i32, i32) {
    %c0_i32 = arith.constant 0 : i32
    %c0_i32_0 = arith.constant 0 : i32
    %c0_i32_1 = arith.constant 0 : i32
    return %c0_i32, %c0_i32_0 : i32, i32
  }
  func.func @transform_7(%arg0: i32) -> (i32, i32) {
    %c0_i32 = arith.constant 0 : i32
    %c0_i32_0 = arith.constant 0 : i32
    return %arg0, %c0_i32 : i32, i32
  }
}

</mosaic_0001>

<llo_original>
// kernel: valuefun_forward.1
$region0: #{valuefun_forward.1}
  #allocation0 [shape = 'u32[]', space=smem, size = 0x4, offset = 0x4, fixed_abs, tag = 'smem constant byte address 0x4 - core index']
  #allocation1 [shape = 'u32[72,128]{1,0:T(1,128)}', space=vmem, size = 0x9000, scoped, tag = 'internal scratch']
  %s0 = inlined_call_operand.vmem [shape: f32[1,128], index: 0, kind: input, shape index: {}]
  %s1 = inlined_call_operand.vmem [shape: bf16[128,256], index: 1, kind: input, shape index: {}]
  %s2 = inlined_call_operand.vmem [shape: f32[1,256], index: 2, kind: input, shape index: {}]
  %s3 = inlined_call_operand.hbm [shape: bf16[256,256], index: 3, kind: input, shape index: {}]
  %s4 = inlined_call_operand.vmem [shape: f32[1,256], index: 4, kind: input, shape index: {}]
  %s5 = inlined_call_operand.vmem [shape: bf16[256,8], index: 5, kind: input, shape index: {}]
  %s6 = inlined_call_operand.vmem [shape: f32[1,8], index: 6, kind: input, shape index: {}]
  %s7 = inlined_call_operand.hbm [shape: f32[1,8], index: 7, kind: output, shape index: {}]
  %s8 = sld [smem:[#allocation0]]
  $region42: #{valuefun_forward.1} parent=0
    _
  %s10 = ssub.s32 1, %s8
  %s11 = scalar_select 0, %s10, %s8
  $region1: #{valuefun_forward.1} parent=0
    #allocation2 [shape = 'u8[131072]{0}', space=vmem, size = 0x20000, scoped, tag = 'input window, operand 3, single buffered']
    #allocation3 [shape = 's32[1]{0}', space=sflag, size = 0x4, scoped, tag = 'scoped memory for valuefun_forward.1']
    #allocation4 [shape = 's32[1]{0}', space=sflag, size = 0x4, scoped, tag = 'scoped memory for valuefun_forward.1']
    #allocation5 [shape = 'u8[4096]{0}', space=vmem, size = 0x1000, scoped, tag = 'output window, operand 0, single buffered']
    %12 = vsyncpa [#allocation3], 0
    %13 = vsyncpa [#allocation4], 0
    // Predicated region
    $region2: #{valuefun_forward.1} parent=1 // pred_check
      _
    $region3: #{valuefun_forward.1} parent=1 // pred_check_branch
      %15 = sbr.rel (0) target = $region5
    $region4: #{valuefun_forward.1} parent=1 // pred_region
      _
    $region5: #{valuefun_forward.1} parent=1 // pred_fallthru
      _
    // Predicated region
    $region6: #{valuefun_forward.1} parent=1 // pred_check
      _
    $region7: #{valuefun_forward.1} parent=1 // pred_check_branch
      %17 = sbr.rel (0) target = $region9
    $region8: #{valuefun_forward.1} parent=1 // pred_region
      _
    $region9: #{valuefun_forward.1} parent=1 // pred_fallthru
      _
    // Predicated region
    $region10: #{valuefun_forward.1} parent=1 // pred_check
      _
    $region11: #{valuefun_forward.1} parent=1 // pred_check_branch
      %19 = sbr.rel (0) target = $region13
    $region12: #{valuefun_forward.1} parent=1 // pred_region
      _
    $region13: #{valuefun_forward.1} parent=1 // pred_fallthru
      _
    // Predicated region
    $region14: #{valuefun_forward.1} parent=1 // pred_check
      _
    $region15: #{valuefun_forward.1} parent=1 // pred_check_branch
      %21 = sbr.rel (0) target = $region17
    $region16: #{valuefun_forward.1} parent=1 // pred_region
      %23 = vsyncadd [#allocation3], 0
      %s24 = sshll.u32 %s3, 4
      %s25 = int_to_ptr.hbm [resolvable:$true] %s24
      %s26 = sshll.u32 [#allocation2], 4
      %s27 = int_to_ptr.vmem [resolvable:$true] %s26
      %32 = dma.hbm_to_vmem [thread:$0]  %s25, 4096, %s27, [#allocation3], 128, 128, 8
    $region17: #{valuefun_forward.1} parent=1 // pred_fallthru
      _
    // Predicated region
    $region18: #{valuefun_forward.1} parent=1 // pred_check
      _
    $region19: #{valuefun_forward.1} parent=1 // pred_check_branch
      %34 = sbr.rel (0) target = $region21
    $region20: #{valuefun_forward.1} parent=1 // pred_region
      _
    $region21: #{valuefun_forward.1} parent=1 // pred_fallthru
      _
    // Predicated region
    $region22: #{valuefun_forward.1} parent=1 // pred_check
      _
    $region23: #{valuefun_forward.1} parent=1 // pred_check_branch
      %36 = sbr.rel (0) target = $region25
    $region24: #{valuefun_forward.1} parent=1 // pred_region
      _
    $region25: #{valuefun_forward.1} parent=1 // pred_fallthru
      _
    // Predicated region
    $region26: #{valuefun_forward.1} parent=1 // pred_check
      _
    $region27: #{valuefun_forward.1} parent=1 // pred_check_branch
      %38 = sbr.rel (0) target = $region29
    $region28: #{valuefun_forward.1} parent=1 // pred_region
      _
    $region29: #{valuefun_forward.1} parent=1 // pred_fallthru
      _
    // Predicated region
    $region30: #{valuefun_forward.1} parent=1 // pred_check
      _
    $region31: #{valuefun_forward.1} parent=1 // pred_check_branch
      %40 = sbr.rel (0) target = $region33
    $region32: #{valuefun_forward.1} parent=1 // pred_region
      %42 = dma.done [#allocation3], 4096
    $region33: #{valuefun_forward.1} parent=1 // pred_fallthru
      _
    %v43 = vld [vmem:[%s0] sm:$0xff]
    %v44 = vpack.c.bf16 %v43, %v43
    %v45 = vld [vmem:[%s1] sm:$0xff]
    %v46 = vld [vmem:[%s1 + $0x8] sm:$0xff]
    %v47 = vld [vmem:[%s1 + $0x10] sm:$0xff]
    %v48 = vld [vmem:[%s1 + $0x18] sm:$0xff]
    %v49 = vld [vmem:[%s1 + $0x20] sm:$0xff]
    %v50 = vld [vmem:[%s1 + $0x28] sm:$0xff]
    %v51 = vld [vmem:[%s1 + $0x30] sm:$0xff]
    %v52 = vld [vmem:[%s1 + $0x38] sm:$0xff]
    %v53 = vld [vmem:[%s1 + $0x40] sm:$0xff]
    %v54 = vld [vmem:[%s1 + $0x48] sm:$0xff]
    %v55 = vld [vmem:[%s1 + $0x50] sm:$0xff]
    %v56 = vld [vmem:[%s1 + $0x58] sm:$0xff]
    %v57 = vld [vmem:[%s1 + $0x60] sm:$0xff]
    %v58 = vld [vmem:[%s1 + $0x68] sm:$0xff]
    %v59 = vld [vmem:[%s1 + $0x70] sm:$0xff]
    %v60 = vld [vmem:[%s1 + $0x78] sm:$0xff]
    %v61 = vld [vmem:[%s2] sm:$0x3]
    %v63 = vperm.slane %v61, 0
    %v64 = vperm.slane %v61, 1
    %v83 = vunpack.c.l.b16 %v45
    %v84 = vunpack.c.h.b16 %v45
    %v85 = vunpack.c.l.b16 %v46
    %v86 = vunpack.c.h.b16 %v46
    %v87 = vunpack.c.l.b16 %v47
    %v88 = vunpack.c.h.b16 %v47
    %v89 = vunpack.c.l.b16 %v48
    %v90 = vunpack.c.h.b16 %v48
    %v91 = vunpack.c.l.b16 %v49
    %v92 = vunpack.c.h.b16 %v49
    %v93 = vunpack.c.l.b16 %v50
    %v94 = vunpack.c.h.b16 %v50
    %v95 = vunpack.c.l.b16 %v51
    %v96 = vunpack.c.h.b16 %v51
    %v97 = vunpack.c.l.b16 %v52
    %v98 = vunpack.c.h.b16 %v52
    %v99 = vunpack.c.l.b16 %v53
    %v100 = vunpack.c.h.b16 %v53
    %v101 = vunpack.c.l.b16 %v54
    %v102 = vunpack.c.h.b16 %v54
    %v103 = vunpack.c.l.b16 %v55
    %v104 = vunpack.c.h.b16 %v55
    %v105 = vunpack.c.l.b16 %v56
    %v106 = vunpack.c.h.b16 %v56
    %v107 = vunpack.c.l.b16 %v57
    %v108 = vunpack.c.h.b16 %v57
    %v109 = vunpack.c.l.b16 %v58
    %v110 = vunpack.c.h.b16 %v58
    %v111 = vunpack.c.l.b16 %v59
    %v112 = vunpack.c.h.b16 %v59
    %v113 = vunpack.c.l.b16 %v60
    %v114 = vunpack.c.h.b16 %v60
    %v115 = vpack.c.b16 %v85, %v83
    %v116 = vpack.c.b16 %v86, %v84
    %v117 = vpack.c.b16 %v89, %v87
    %v118 = vpack.c.b16 %v90, %v88
    %v119 = vpack.c.b16 %v93, %v91
    %v120 = vpack.c.b16 %v94, %v92
    %v121 = vpack.c.b16 %v97, %v95
    %v122 = vpack.c.b16 %v98, %v96
    %v123 = vpack.c.b16 %v101, %v99
    %v124 = vpack.c.b16 %v102, %v100
    %v125 = vpack.c.b16 %v105, %v103
    %v126 = vpack.c.b16 %v106, %v104
    %v127 = vpack.c.b16 %v109, %v107
    %v128 = vpack.c.b16 %v110, %v108
    %v129 = vpack.c.b16 %v113, %v111
    %v130 = vpack.c.b16 %v114, %v112
    %147 = vmatpush.bf16.msra.mxu0 %v129
    %148 = vmatpush.bf16.msra.mxu0 %v127
    %149 = vmatpush.bf16.msra.mxu0 %v125
    %150 = vmatpush.bf16.msra.mxu0 %v123
    %151 = vmatpush.bf16.msra.mxu0 %v121
    %152 = vmatpush.bf16.msra.mxu0 %v119
    %153 = vmatpush.bf16.msra.mxu0 %v117
    %154 = vmatpush.bf16.msra.mxu0 %v115
    %155 = vmatmul.bf16.gmra.mxu0 %v44
    %v156 = vpop.f32.mrf.mxu0
    %v157 = vadd.f32 %v63, %v156
    %v158 = vpop.f32.mrf.mxu0
    %159 = vdwg.mxu0
    %160 = vmatpush.bf16.msra.mxu0 %v130
    %161 = vmatpush.bf16.msra.mxu0 %v128
    %162 = vmatpush.bf16.msra.mxu0 %v126
    %163 = vmatpush.bf16.msra.mxu0 %v124
    %164 = vmatpush.bf16.msra.mxu0 %v122
    %165 = vmatpush.bf16.msra.mxu0 %v120
    %166 = vmatpush.bf16.msra.mxu0 %v118
    %167 = vmatpush.bf16.msra.mxu0 %v116
    %168 = vmatmul.bf16.gmra.mxu0 %v44
    %v169 = vpop.f32.mrf.mxu0
    %v170 = vadd.f32 %v64, %v169
    %v171 = vpop.f32.mrf.mxu0
    %172 = vdwg.mxu0
    %v173 = vmax.f32 %v157, 0.0
    %v174 = vmax.f32 %v170, 0.0
    %v175 = vpack.c.bf16 %v173, %v173
    %v176 = vpack.c.bf16 %v174, %v174
    %v177 = vld [vmem:[#allocation2] sm:$0xff]
    %v178 = vld [vmem:[#allocation2 + $0x8] sm:$0xff]
    %v179 = vld [vmem:[#allocation2 + $0x10] sm:$0xff]
    %v180 = vld [vmem:[#allocation2 + $0x18] sm:$0xff]
    %v181 = vld [vmem:[#allocation2 + $0x20] sm:$0xff]
    %v182 = vld [vmem:[#allocation2 + $0x28] sm:$0xff]
    %v183 = vld [vmem:[#allocation2 + $0x30] sm:$0xff]
    %v184 = vld [vmem:[#allocation2 + $0x38] sm:$0xff]
    %v185 = vld [vmem:[#allocation2 + $0x40] sm:$0xff]
    %v186 = vld [vmem:[#allocation2 + $0x48] sm:$0xff]
    %v187 = vld [vmem:[#allocation2 + $0x50] sm:$0xff]
    %v188 = vld [vmem:[#allocation2 + $0x58] sm:$0xff]
    %v189 = vld [vmem:[#allocation2 + $0x60] sm:$0xff]
    %v190 = vld [vmem:[#allocation2 + $0x68] sm:$0xff]
    %v191 = vld [vmem:[#allocation2 + $0x70] sm:$0xff]
    %v192 = vld [vmem:[#allocation2 + $0x78] sm:$0xff]
    %v193 = vld [vmem:[#allocation2 + $0x80] sm:$0xff]
    %v194 = vld [vmem:[#allocation2 + $0x88] sm:$0xff]
    %v195 = vld [vmem:[#allocation2 + $0x90] sm:$0xff]
    %v196 = vld [vmem:[#allocation2 + $0x98] sm:$0xff]
    %v197 = vld [vmem:[#allocation2 + $0xa0] sm:$0xff]
    %v198 = vld [vmem:[#allocation2 + $0xa8] sm:$0xff]
    %v199 = vld [vmem:[#allocation2 + $0xb0] sm:$0xff]
    %v200 = vld [vmem:[#allocation2 + $0xb8] sm:$0xff]
    %v201 = vld [vmem:[#allocation2 + $0xc0] sm:$0xff]
    %v202 = vld [vmem:[#allocation2 + $0xc8] sm:$0xff]
    %v203 = vld [vmem:[#allocation2 + $0xd0] sm:$0xff]
    %v204 = vld [vmem:[#allocation2 + $0xd8] sm:$0xff]
    %v205 = vld [vmem:[#allocation2 + $0xe0] sm:$0xff]
    %v206 = vld [vmem:[#allocation2 + $0xe8] sm:$0xff]
    %v207 = vld [vmem:[#allocation2 + $0xf0] sm:$0xff]
    %v208 = vld [vmem:[#allocation2 + $0xf8] sm:$0xff]
    %v209 = vld [vmem:[%s4] sm:$0x3]
    %v211 = vperm.slane %v209, 0
    %v212 = vperm.slane %v209, 1
    %v247 = vunpack.c.l.b16 %v177
    %v248 = vunpack.c.h.b16 %v177
    %v249 = vunpack.c.l.b16 %v178
    %v250 = vunpack.c.h.b16 %v178
    %v251 = vunpack.c.l.b16 %v179
    %v252 = vunpack.c.h.b16 %v179
    %v253 = vunpack.c.l.b16 %v180
    %v254 = vunpack.c.h.b16 %v180
    %v255 = vunpack.c.l.b16 %v181
    %v256 = vunpack.c.h.b16 %v181
    %v257 = vunpack.c.l.b16 %v182
    %v258 = vunpack.c.h.b16 %v182
    %v259 = vunpack.c.l.b16 %v183
    %v260 = vunpack.c.h.b16 %v183
    %v261 = vunpack.c.l.b16 %v184
    %v262 = vunpack.c.h.b16 %v184
    %v263 = vunpack.c.l.b16 %v185
    %v264 = vunpack.c.h.b16 %v185
    %v265 = vunpack.c.l.b16 %v186
    %v266 = vunpack.c.h.b16 %v186
    %v267 = vunpack.c.l.b16 %v187
    %v268 = vunpack.c.h.b16 %v187
    %v269 = vunpack.c.l.b16 %v188
    %v270 = vunpack.c.h.b16 %v188
    %v271 = vunpack.c.l.b16 %v189
    %v272 = vunpack.c.h.b16 %v189
    %v273 = vunpack.c.l.b16 %v190
    %v274 = vunpack.c.h.b16 %v190
    %v275 = vunpack.c.l.b16 %v191
    %v276 = vunpack.c.h.b16 %v191
    %v277 = vunpack.c.l.b16 %v192
    %v278 = vunpack.c.h.b16 %v192
    %v279 = vunpack.c.l.b16 %v193
    %v280 = vunpack.c.h.b16 %v193
    %v281 = vunpack.c.l.b16 %v194
    %v282 = vunpack.c.h.b16 %v194
    %v283 = vunpack.c.l.b16 %v195
    %v284 = vunpack.c.h.b16 %v195
    %v285 = vunpack.c.l.b16 %v196
    %v286 = vunpack.c.h.b16 %v196
    %v287 = vunpack.c.l.b16 %v197
    %v288 = vunpack.c.h.b16 %v197
    %v289 = vunpack.c.l.b16 %v198
    %v290 = vunpack.c.h.b16 %v198
    %v291 = vunpack.c.l.b16 %v199
    %v292 = vunpack.c.h.b16 %v199
    %v293 = vunpack.c.l.b16 %v200
    %v294 = vunpack.c.h.b16 %v200
    %v295 = vunpack.c.l.b16 %v201
    %v296 = vunpack.c.h.b16 %v201
    %v297 = vunpack.c.l.b16 %v202
    %v298 = vunpack.c.h.b16 %v202
    %v299 = vunpack.c.l.b16 %v203
    %v300 = vunpack.c.h.b16 %v203
    %v301 = vunpack.c.l.b16 %v204
    %v302 = vunpack.c.h.b16 %v204
    %v303 = vunpack.c.l.b16 %v205
    %v304 = vunpack.c.h.b16 %v205
    %v305 = vunpack.c.l.b16 %v206
    %v306 = vunpack.c.h.b16 %v206
    %v307 = vunpack.c.l.b16 %v207
    %v308 = vunpack.c.h.b16 %v207
    %v309 = vunpack.c.l.b16 %v208
    %v310 = vunpack.c.h.b16 %v208
    %v311 = vpack.c.b16 %v249, %v247
    %v312 = vpack.c.b16 %v250, %v248
    %v313 = vpack.c.b16 %v253, %v251
    %v314 = vpack.c.b16 %v254, %v252
    %v315 = vpack.c.b16 %v257, %v255
    %v316 = vpack.c.b16 %v258, %v256
    %v317 = vpack.c.b16 %v261, %v259
    %v318 = vpack.c.b16 %v262, %v260
    %v319 = vpack.c.b16 %v265, %v263
    %v320 = vpack.c.b16 %v266, %v264
    %v321 = vpack.c.b16 %v269, %v267
    %v322 = vpack.c.b16 %v270, %v268
    %v323 = vpack.c.b16 %v273, %v271
    %v324 = vpack.c.b16 %v274, %v272
    %v325 = vpack.c.b16 %v277, %v275
    %v326 = vpack.c.b16 %v278, %v276
    %v327 = vpack.c.b16 %v281, %v279
    %v328 = vpack.c.b16 %v282, %v280
    %v329 = vpack.c.b16 %v285, %v283
    %v330 = vpack.c.b16 %v286, %v284
    %v331 = vpack.c.b16 %v289, %v287
    %v332 = vpack.c.b16 %v290, %v288
    %v333 = vpack.c.b16 %v293, %v291
    %v334 = vpack.c.b16 %v294, %v292
    %v335 = vpack.c.b16 %v297, %v295
    %v336 = vpack.c.b16 %v298, %v296
    %v337 = vpack.c.b16 %v301, %v299
    %v338 = vpack.c.b16 %v302, %v300
    %v339 = vpack.c.b16 %v305, %v303
    %v340 = vpack.c.b16 %v306, %v304
    %v341 = vpack.c.b16 %v309, %v307
    %v342 = vpack.c.b16 %v310, %v308
    %375 = vmatpush.bf16.msra.mxu0 %v325
    %376 = vmatpush.bf16.msra.mxu0 %v323
    %377 = vmatpush.bf16.msra.mxu0 %v321
    %378 = vmatpush.bf16.msra.mxu0 %v319
    %379 = vmatpush.bf16.msra.mxu0 %v317
    %380 = vmatpush.bf16.msra.mxu0 %v315
    %381 = vmatpush.bf16.msra.mxu0 %v313
    %382 = vmatpush.bf16.msra.mxu0 %v311
    %383 = vmatmul.bf16.gmra.mxu0 %v175
    %v384 = vpop.f32.mrf.mxu0
    %v385 = vadd.f32 %v211, %v384
    %v386 = vpop.f32.mrf.mxu0
    %387 = vdwg.mxu0
    %388 = vmatpush.bf16.msra.mxu0 %v341
    %389 = vmatpush.bf16.msra.mxu0 %v339
    %390 = vmatpush.bf16.msra.mxu0 %v337
    %391 = vmatpush.bf16.msra.mxu0 %v335
    %392 = vmatpush.bf16.msra.mxu0 %v333
    %393 = vmatpush.bf16.msra.mxu0 %v331
    %394 = vmatpush.bf16.msra.mxu0 %v329
    %395 = vmatpush.bf16.msra.mxu0 %v327
    %396 = vmatmul.bf16.gmra.mxu0 %v176
    %v397 = vpop.f32.mrf.mxu0
    %v398 = vadd.f32 %v385, %v397
    %v399 = vpop.f32.mrf.mxu0
    %400 = vdwg.mxu0
    %401 = vmatpush.bf16.msra.mxu0 %v326
    %402 = vmatpush.bf16.msra.mxu0 %v324
    %403 = vmatpush.bf16.msra.mxu0 %v322
    %404 = vmatpush.bf16.msra.mxu0 %v320
    %405 = vmatpush.bf16.msra.mxu0 %v318
    %406 = vmatpush.bf16.msra.mxu0 %v316
    %407 = vmatpush.bf16.msra.mxu0 %v314
    %408 = vmatpush.bf16.msra.mxu0 %v312
    %409 = vmatmul.bf16.gmra.mxu0 %v175
    %v410 = vpop.f32.mrf.mxu0
    %v411 = vadd.f32 %v212, %v410
    %v412 = vpop.f32.mrf.mxu0
    %413 = vdwg.mxu0
    %414 = vmatpush.bf16.msra.mxu0 %v342
    %415 = vmatpush.bf16.msra.mxu0 %v340
    %416 = vmatpush.bf16.msra.mxu0 %v338
    %417 = vmatpush.bf16.msra.mxu0 %v336
    %418 = vmatpush.bf16.msra.mxu0 %v334
    %419 = vmatpush.bf16.msra.mxu0 %v332
    %420 = vmatpush.bf16.msra.mxu0 %v330
    %421 = vmatpush.bf16.msra.mxu0 %v328
    %422 = vmatmul.bf16.gmra.mxu0 %v176
    %v423 = vpop.f32.mrf.mxu0
    %v424 = vadd.f32 %v411, %v423
    %v425 = vpop.f32.mrf.mxu0
    %426 = vdwg.mxu0
    %v427 = vmax.f32 %v398, 0.0
    %v428 = vmax.f32 %v424, 0.0
    %v429 = vpack.c.bf16 %v427, %v427
    %v430 = vpack.c.bf16 %v428, %v428
    %v431 = vld [vmem:[%s5] sm:$0xf]
    %v432 = vld [vmem:[%s5 + $0x4] sm:$0xf]
    %v433 = vld [vmem:[%s5 + $0x8] sm:$0xf]
    %v434 = vld [vmem:[%s5 + $0xc] sm:$0xf]
    %v435 = vld [vmem:[%s5 + $0x10] sm:$0xf]
    %v436 = vld [vmem:[%s5 + $0x14] sm:$0xf]
    %v437 = vld [vmem:[%s5 + $0x18] sm:$0xf]
    %v438 = vld [vmem:[%s5 + $0x1c] sm:$0xf]
    %v439 = vld [vmem:[%s5 + $0x20] sm:$0xf]
    %v440 = vld [vmem:[%s5 + $0x24] sm:$0xf]
    %v441 = vld [vmem:[%s5 + $0x28] sm:$0xf]
    %v442 = vld [vmem:[%s5 + $0x2c] sm:$0xf]
    %v443 = vld [vmem:[%s5 + $0x30] sm:$0xf]
    %v444 = vld [vmem:[%s5 + $0x34] sm:$0xf]
    %v445 = vld [vmem:[%s5 + $0x38] sm:$0xf]
    %v446 = vld [vmem:[%s5 + $0x3c] sm:$0xf]
    %v447 = vld [vmem:[%s5 + $0x40] sm:$0xf]
    %v448 = vld [vmem:[%s5 + $0x44] sm:$0xf]
    %v449 = vld [vmem:[%s5 + $0x48] sm:$0xf]
    %v450 = vld [vmem:[%s5 + $0x4c] sm:$0xf]
    %v451 = vld [vmem:[%s5 + $0x50] sm:$0xf]
    %v452 = vld [vmem:[%s5 + $0x54] sm:$0xf]
    %v453 = vld [vmem:[%s5 + $0x58] sm:$0xf]
    %v454 = vld [vmem:[%s5 + $0x5c] sm:$0xf]
    %v455 = vld [vmem:[%s5 + $0x60] sm:$0xf]
    %v456 = vld [vmem:[%s5 + $0x64] sm:$0xf]
    %v457 = vld [vmem:[%s5 + $0x68] sm:$0xf]
    %v458 = vld [vmem:[%s5 + $0x6c] sm:$0xf]
    %v459 = vld [vmem:[%s5 + $0x70] sm:$0xf]
    %v460 = vld [vmem:[%s5 + $0x74] sm:$0xf]
    %v461 = vld [vmem:[%s5 + $0x78] sm:$0xf]
    %v462 = vld [vmem:[%s5 + $0x7c] sm:$0xf]
    %v463 = vld [vmem:[%s6] sm:$0x1]
    %v465 = vperm.slane %v463, 0
    %v499 = vunpack.c.l.b16 %v431
    %v500 = vunpack.c.l.b16 %v432
    %v501 = vunpack.c.l.b16 %v433
    %v502 = vunpack.c.l.b16 %v434
    %v503 = vunpack.c.l.b16 %v435
    %v504 = vunpack.c.l.b16 %v436
    %v505 = vunpack.c.l.b16 %v437
    %v506 = vunpack.c.l.b16 %v438
    %v507 = vunpack.c.l.b16 %v439
    %v508 = vunpack.c.l.b16 %v440
    %v509 = vunpack.c.l.b16 %v441
    %v510 = vunpack.c.l.b16 %v442
    %v511 = vunpack.c.l.b16 %v443
    %v512 = vunpack.c.l.b16 %v444
    %v513 = vunpack.c.l.b16 %v445
    %v514 = vunpack.c.l.b16 %v446
    %v515 = vunpack.c.l.b16 %v447
    %v516 = vunpack.c.l.b16 %v448
    %v517 = vunpack.c.l.b16 %v449
    %v518 = vunpack.c.l.b16 %v450
    %v519 = vunpack.c.l.b16 %v451
    %v520 = vunpack.c.l.b16 %v452
    %v521 = vunpack.c.l.b16 %v453
    %v522 = vunpack.c.l.b16 %v454
    %v523 = vunpack.c.l.b16 %v455
    %v524 = vunpack.c.l.b16 %v456
    %v525 = vunpack.c.l.b16 %v457
    %v526 = vunpack.c.l.b16 %v458
    %v527 = vunpack.c.l.b16 %v459
    %v528 = vunpack.c.l.b16 %v460
    %v529 = vunpack.c.l.b16 %v461
    %v530 = vunpack.c.l.b16 %v462
    %v531 = vpack.c.b16 %v500, %v499
    %v532 = vpack.c.b16 %v502, %v501
    %v533 = vpack.c.b16 %v504, %v503
    %v534 = vpack.c.b16 %v506, %v505
    %v535 = vpack.c.b16 %v508, %v507
    %v536 = vpack.c.b16 %v510, %v509
    %v537 = vpack.c.b16 %v512, %v511
    %v538 = vpack.c.b16 %v514, %v513
    %v539 = vpack.c.b16 %v516, %v515
    %v540 = vpack.c.b16 %v518, %v517
    %v541 = vpack.c.b16 %v520, %v519
    %v542 = vpack.c.b16 %v522, %v521
    %v543 = vpack.c.b16 %v524, %v523
    %v544 = vpack.c.b16 %v526, %v525
    %v545 = vpack.c.b16 %v528, %v527
    %v546 = vpack.c.b16 %v530, %v529
    %563 = vmatpush.bf16.msra.mxu0 %v538
    %564 = vmatpush.bf16.msra.mxu0 %v537
    %565 = vmatpush.bf16.msra.mxu0 %v536
    %566 = vmatpush.bf16.msra.mxu0 %v535
    %567 = vmatpush.bf16.msra.mxu0 %v534
    %568 = vmatpush.bf16.msra.mxu0 %v533
    %569 = vmatpush.bf16.msra.mxu0 %v532
    %570 = vmatpush.bf16.msra.mxu0 %v531
    %571 = vmatmul.bf16.gmra.mxu0 %v429
    %v572 = vpop.f32.mrf.mxu0
    %v573 = vadd.f32 %v465, %v572
    %v574 = vpop.f32.mrf.mxu0
    %575 = vdwg.mxu0
    %576 = vmatpush.bf16.msra.mxu0 %v546
    %577 = vmatpush.bf16.msra.mxu0 %v545
    %578 = vmatpush.bf16.msra.mxu0 %v544
    %579 = vmatpush.bf16.msra.mxu0 %v543
    %580 = vmatpush.bf16.msra.mxu0 %v542
    %581 = vmatpush.bf16.msra.mxu0 %v541
    %582 = vmatpush.bf16.msra.mxu0 %v540
    %583 = vmatpush.bf16.msra.mxu0 %v539
    %584 = vmatmul.bf16.gmra.mxu0 %v430
    %v585 = vpop.f32.mrf.mxu0
    %v586 = vadd.f32 %v573, %v585
    %v587 = vpop.f32.mrf.mxu0
    %588 = vdwg.mxu0
    %vm589 = vcmask 64512
    %590 = vst.msk [vmem:[#allocation5] sm:$0xff] %vm589, %v586
    // Predicated region
    $region34: #{valuefun_forward.1} parent=1 // pred_check
      _
    $region35: #{valuefun_forward.1} parent=1 // pred_check_branch
      %592 = sbr.rel (0) target = $region37
    $region36: #{valuefun_forward.1} parent=1 // pred_region
      %594 = vsyncadd [#allocation4], 112
      %s595 = sshll.u32 [#allocation5], 4
      %s596 = int_to_ptr.vmem [resolvable:$true] %s595
      %s597 = sshll.u32 %s7, 4
      %s598 = int_to_ptr.hbm [resolvable:$true] %s597
      %603 = dma.vmem_to_hbm [thread:$0]  %s596, 16, %s598, [#allocation4], 16, 16, 1
    $region37: #{valuefun_forward.1} parent=1 // pred_fallthru
      _
    // Predicated region
    $region38: #{valuefun_forward.1} parent=1 // pred_check
      _
    $region39: #{valuefun_forward.1} parent=1 // pred_check_branch
      %605 = sbr.rel (0) target = $region41
    $region40: #{valuefun_forward.1} parent=1 // pred_region
      %607 = dma.done [#allocation4], 128
    $region41: #{valuefun_forward.1} parent=1 // pred_fallthru
      _
    %608 = vsyncpa [#allocation3], 1
    %609 = vsyncpa [#allocation4], 1

</llo_original>
